<compile_context>
chip_gen: v6e
topology: v6e:2x2x1
jax: 0.10.0
libtpu: 0.0.40
codegen_flags: <defaults>
</compile_context>

<pallas_src>
import jax
import jax.numpy as jnp
from jax.experimental import pallas as pl
from jax.experimental.pallas import tpu as pltpu

# ---------------- config (mirrors the `config` object referenced in PyTorch) ---
HIDDEN_SIZE = 32     # config.hidden_size
FC_SIZE = 128        # self.fc = nn.Linear(hidden_size, 128)


def _pick_row_tile(n_rows, target=512):
    """Largest multiple of 8 <= target that divides n_rows (n_rows % 8 == 0)."""
    tile = 8
    for cand in range(8, min(target, n_rows) + 1, 8):
        if n_rows % cand == 0:
            tile = cand
    return tile


# -----------------------------------------------------------------------------
# Stage 1: non-recurrent input-gate GEMM   xg = x @ W_ih^T + (b_ih + b_hh)
# Gridded over row tiles of T*Bp (parallel -> both TCs on v7x, pipelined DMA).
# -----------------------------------------------------------------------------
def _input_gates_kernel(x_ref, wih_ref, b_ref, xg_ref):
    xg_ref[...] = (
        jnp.dot(x_ref[...].astype(jnp.bfloat16), wih_ref[...],
                preferred_element_type=jnp.float32)
        + b_ref[...]
    )


# -----------------------------------------------------------------------------
# Stage 2: sequential LSTM recurrence (single program).  Only h @ W_hh^T plus
# the elementwise gate math sits on the serial critical path.
# -----------------------------------------------------------------------------
def _lstm_recurrence_kernel(xg_ref, h0_ref, c0_ref, whh_ref,
                            h_all_ref, hn_ref, cn_ref):
    TB = xg_ref.shape[0]
    Bp, H = h0_ref.shape
    T = TB // Bp

    whh = whh_ref[...]          # hoisted: load W_hh once, not per unrolled iter

    def step(t, carry):
        h, c = carry
        base = pl.multiple_of(t * Bp, Bp)
        gates = xg_ref[pl.ds(base, Bp), :] + jnp.dot(
            h, whh, preferred_element_type=jnp.float32)            # (Bp, 4H)
        # Single full-width EUP pass; g-gate weight/bias columns were pre-scaled
        # by 2 in the wrapper, so tanh(x) = 2*sigmoid(2x) - 1.
        sg = jax.nn.sigmoid(gates)
        i_g = sg[:, 0 * H:1 * H]
        f_g = sg[:, 1 * H:2 * H]
        g_g = 2.0 * sg[:, 2 * H:3 * H] - 1.0
        o_g = sg[:, 3 * H:4 * H]
        c_new = f_g * c + i_g * g_g
        h_new = o_g * jnp.tanh(c_new)
        h_all_ref[pl.ds(base, Bp), :] = h_new
        return h_new, c_new

    h_fin, c_fin = jax.lax.fori_loop(
        0, T, step, (h0_ref[...], c0_ref[...]), unroll=min(8, T))
    hn_ref[...] = h_fin
    cn_ref[...] = c_fin


# -----------------------------------------------------------------------------
# Stage 3: dueling head, fused to a single linear (W_q = W_adv - mean + W_val),
# lane-dense 128-wide output.  Gridded over row tiles (parallel).
# -----------------------------------------------------------------------------
def _head_kernel(h_ref, wfc_ref, bfc_ref, wq_ref, bq_ref, q_ref):
    fc = jnp.maximum(
        jnp.dot(h_ref[...].astype(jnp.bfloat16), wfc_ref[...],
                preferred_element_type=jnp.float32) + bfc_ref[...],
        0.0,
    )                                                               # (rm, 128)
    q_ref[...] = (
        jnp.dot(fc.astype(jnp.bfloat16), wq_ref[...],
                preferred_element_type=jnp.float32)
        + bq_ref[...]
    )                                                               # (rm, QN)


def r2d2_rnd_forward(params, x, hidden=None):
    """x: (B, T, num_inputs) float32.  Returns (qvalue (B,T,A), (h_n, c_n))."""
    B, T, D = x.shape
    H = HIDDEN_SIZE
    F = FC_SIZE
    A = params["w_adv"].shape[1]
    QN = ((A + 127) // 128) * 128            # lane-dense head-output width

    # Pad batch to a multiple of 8 (f32 sublane count).
    Bp = ((B + 7) // 8) * 8
    pad = Bp - B
    TB = T * Bp

    if hidden is None:
        h0 = jnp.zeros((B, H), jnp.float32)
        c0 = jnp.zeros((B, H), jnp.float32)
    else:
        h0 = hidden[0].reshape(B, H).astype(jnp.float32)
        c0 = hidden[1].reshape(B, H).astype(jnp.float32)
    h0p = jnp.pad(h0, ((0, pad), (0, 0)))
    c0p = jnp.pad(c0, ((0, pad), (0, 0)))

    # TODO(synk): for production num_inputs >> 4H this transpose+pad is an extra
    # full HBM pass over x; instead grid stage-1 over (B,T,D) blocks directly
    # and reorder the much smaller (T*Bp, 4H) gate tensor.
    x_tbd = jnp.transpose(x.astype(jnp.float32), (1, 0, 2))   # (T, B, D)
    x_tbd = jnp.pad(x_tbd, ((0, 0), (0, pad), (0, 0)))        # (T, Bp, D)
    x2 = x_tbd.reshape(TB, D)

    # ---- fused / pre-scaled parameters (done once, wrapper-side) -------------
    # g-gate columns scaled by 2 so the kernel can use tanh(x) = 2*sigmoid(2x)-1.
    g_scale = jnp.ones((4 * H,), jnp.float32).at[2 * H:3 * H].set(2.0)
    b_lstm = (params["b_ih"] + params["b_hh"]) * g_scale                 # (1,4H)
    w_ih_bf = (params["w_ih_t"] * g_scale).astype(jnp.bfloat16)          # (D,4H)
    w_hh = params["w_hh_t"] * g_scale                                    # (H,4H) f32
    # Dueling head folded into one linear:  q = fc @ W_q + b_q  (exact identity)
    w_q = (params["w_adv"] - jnp.mean(params["w_adv"], axis=1, keepdims=True)
           + params["w_val"])                                            # (F, A)
    b_q = (params["b_adv"] - jnp.mean(params["b_adv"], axis=1, keepdims=True)
           + params["b_val"])                                            # (1, A)
    w_q_bf = jnp.pad(w_q, ((0, 0), (0, QN - A))).astype(jnp.bfloat16)    # (F,QN)
    b_q_p = jnp.pad(b_q, ((0, 0), (0, QN - A)))                          # (1,QN)
    w_fc_bf = params["w_fc"].astype(jnp.bfloat16)                        # (H, F)
    b_fc = params["b_fc"]                                                # (1, F)

    rm = _pick_row_tile(TB)
    n_row_tiles = TB // rm

    # ---- stage 1: xg = x @ W_ih^T + b (row-parallel, streamed) ---------------
    xg = pl.pallas_call(
        _input_gates_kernel,
        out_shape=jax.ShapeDtypeStruct((TB, 4 * H), jnp.float32),
        grid=(n_row_tiles,),
        in_specs=[
            pl.BlockSpec((rm, D), lambda i: (i, 0)),
            pl.BlockSpec((D, 4 * H), lambda i: (0, 0)),
            pl.BlockSpec((1, 4 * H), lambda i: (0, 0)),
        ],
        out_specs=pl.BlockSpec((rm, 4 * H), lambda i: (i, 0)),
        compiler_params=pltpu.CompilerParams(
            dimension_semantics=("parallel",)),
    )(x2, w_ih_bf, b_lstm)

    # ---- stage 2: sequential LSTM recurrence ---------------------------------
    resident_bytes = (TB * 4 * H + TB * H) * 4
    vmem_limit = None
    if 2 * resident_bytes > (12 << 20):   # raise only when the default won't do
        vmem_limit = min(int(2.5 * resident_bytes) + (4 << 20), 96 << 20)

    full = lambda shape: pl.BlockSpec(shape, lambda i: (0,) * len(shape))
    h_all, h_n, c_n = pl.pallas_call(
        _lstm_recurrence_kernel,
        out_shape=(
            jax.ShapeDtypeStruct((TB, H), jnp.float32),
            jax.ShapeDtypeStruct((Bp, H), jnp.float32),
            jax.ShapeDtypeStruct((Bp, H), jnp.float32),
        ),
        grid=(1,),
        in_specs=[
            full((TB, 4 * H)),        # xg
            full((Bp, H)),            # h0
            full((Bp, H)),            # c0
            full((H, 4 * H)),         # W_hh^T (f32, g block pre-scaled)
        ],
        out_specs=[
            full((TB, H)),            # h for every time step
            full((Bp, H)),            # h_n
            full((Bp, H)),            # c_n
        ],
        compiler_params=pltpu.CompilerParams(
            dimension_semantics=("arbitrary",),
            vmem_limit_bytes=vmem_limit),
    )(xg, h0p, c0p, w_hh)

    # ---- stage 3: fused dueling head (row-parallel, lane-dense output) -------
    q2 = pl.pallas_call(
        _head_kernel,
        out_shape=jax.ShapeDtypeStruct((TB, QN), jnp.float32),
        grid=(n_row_tiles,),
        in_specs=[
            pl.BlockSpec((rm, H), lambda i: (i, 0)),
            pl.BlockSpec((H, F), lambda i: (0, 0)),
            pl.BlockSpec((1, F), lambda i: (0, 0)),
            pl.BlockSpec((F, QN), lambda i: (0, 0)),
            pl.BlockSpec((1, QN), lambda i: (0, 0)),
        ],
        out_specs=pl.BlockSpec((rm, QN), lambda i: (i, 0)),
        compiler_params=pltpu.CompilerParams(
            dimension_semantics=("parallel",)),
    )(h_all, w_fc_bf, b_fc, w_q_bf, b_q_p)

    q = q2.reshape(T, Bp, QN)[:, :B, :A]
    qvalue = jnp.transpose(q, (1, 0, 2))                 # (B, T, A)
    # PyTorch LSTM returns hidden as (num_layers=1, B, H)
    return qvalue, (h_n[None, :B, :], c_n[None, :B, :])


def _reference_forward(params, x, hidden=None):
    """Plain-JAX f32 reference (matches the PyTorch math exactly)."""
    B, T, D = x.shape
    H = HIDDEN_SIZE
    if hidden is None:
        h = jnp.zeros((B, H), jnp.float32)
        c = jnp.zeros((B, H), jnp.float32)
    else:
        h, c = hidden[0].reshape(B, H), hidden[1].reshape(B, H)
    qs = []
    for t in range(T):
        g = (x[:, t, :] @ params["w_ih_t"] + h @ params["w_hh_t"]
             + params["b_ih"] + params["b_hh"])
        i = jax.nn.sigmoid(g[:, :H])
        f = jax.nn.sigmoid(g[:, H:2 * H])
        gg = jnp.tanh(g[:, 2 * H:3 * H])
        o = jax.nn.sigmoid(g[:, 3 * H:])
        c = f * c + i * gg
        h = o * jnp.tanh(c)
        fc = jnp.maximum(h @ params["w_fc"] + params["b_fc"], 0.0)
        adv = fc @ params["w_adv"] + params["b_adv"]
        val = fc @ params["w_val"] + params["b_val"]
        qs.append(val + (adv - adv.mean(axis=-1, keepdims=True)))
    return jnp.stack(qs, axis=1), (h[None], c[None])


def make_params(key, num_inputs, num_outputs):
    H, F = HIDDEN_SIZE, FC_SIZE
    ks = jax.random.split(key, 10)
    scale = 0.1
    return {
        # LSTM (stored transposed: x @ W^T form, gate order i,f,g,o)
        "w_ih_t": scale * jax.random.normal(ks[0], (num_inputs, 4 * H), jnp.float32),
        "w_hh_t": scale * jax.random.normal(ks[1], (H, 4 * H), jnp.float32),
        "b_ih": scale * jax.random.normal(ks[2], (1, 4 * H), jnp.float32),
        "b_hh": scale * jax.random.normal(ks[3], (1, 4 * H), jnp.float32),
        # fc, fc_adv, fc_val (transposed)
        "w_fc": scale * jax.random.normal(ks[4], (H, F), jnp.float32),
        "b_fc": scale * jax.random.normal(ks[5], (1, F), jnp.float32),
        "w_adv": scale * jax.random.normal(ks[6], (F, num_outputs), jnp.float32),
        "b_adv": scale * jax.random.normal(ks[7], (1, num_outputs), jnp.float32),
        "w_val": scale * jax.random.normal(ks[8], (F, 1), jnp.float32),
        "b_val": scale * jax.random.normal(ks[9], (1, 1), jnp.float32),
    }


if __name__ == "__main__":
    B, T = 2, 8
    NUM_INPUTS, NUM_OUTPUTS = 4, 6
    # bf16 MXU operands in the batched GEMMs -> relax tolerance vs f32 reference.
    ATOL = 2e-2

    key = jax.random.PRNGKey(0)
    k_param, k_x, k_h, k_c = jax.random.split(key, 4)
    params = make_params(k_param, NUM_INPUTS, NUM_OUTPUTS)
    x = jax.random.normal(k_x, (B, T, NUM_INPUTS), jnp.float32)

    # --- default (zero) initial hidden state
    qvalue, (h_n, c_n) = r2d2_rnd_forward(params, x, hidden=None)
    jax.block_until_ready((qvalue, h_n, c_n))

    q_ref, (h_ref, c_ref) = _reference_forward(params, x, hidden=None)
    assert qvalue.shape == (B, T, NUM_OUTPUTS)
    assert h_n.shape == (1, B, HIDDEN_SIZE) and c_n.shape == (1, B, HIDDEN_SIZE)
    assert jnp.allclose(qvalue, q_ref, atol=ATOL), "qvalue mismatch"
    assert jnp.allclose(h_n, h_ref, atol=ATOL), "h_n mismatch"
    assert jnp.allclose(c_n, c_ref, atol=ATOL), "c_n mismatch"

    # --- explicit initial hidden state (exercises the hidden path too)
    h0 = 0.1 * jax.random.normal(k_h, (1, B, HIDDEN_SIZE), jnp.float32)
    c0 = 0.1 * jax.random.normal(k_c, (1, B, HIDDEN_SIZE), jnp.float32)
    qvalue2, (h_n2, c_n2) = r2d2_rnd_forward(params, x, hidden=(h0, c0))
    jax.block_until_ready((qvalue2, h_n2, c_n2))
    q_ref2, (h_ref2, c_ref2) = _reference_forward(params, x, hidden=(h0, c0))
    assert jnp.allclose(qvalue2, q_ref2, atol=ATOL), "qvalue mismatch (hidden)"
    assert jnp.allclose(h_n2, h_ref2, atol=ATOL), "h_n mismatch (hidden)"
    assert jnp.allclose(c_n2, c_ref2, atol=ATOL), "c_n mismatch (hidden)"

    print("KERNEL_OK")
</pallas_src>

<mosaic_0001>
module attributes {stable_mosaic.version = 11 : i64} {
  func.func @_input_gates_kernel(%arg0: i32, %arg1: memref<64x4xf32, #tpu.memory_space<vmem>>, %arg2: memref<4x128xbf16, #tpu.memory_space<vmem>>, %arg3: memref<1x128xf32, #tpu.memory_space<vmem>>, %arg4: memref<64x128xf32, #tpu.memory_space<vmem>>) attributes {dimension_semantics = [#tpu.dimension_semantics<parallel>], iteration_bounds = array<i64: 1>, scalar_prefetch = 0 : i64, scratch_operands = 0 : i64, tpu.core_type = #tpu.core_type<tc>, window_params = [{transform_indices = @transform_0, window_bounds = array<i64: 64, 4>}, {pipeline_mode = #tpu.pipeline_mode<synchronous>, transform_indices = @transform_1, window_bounds = array<i64: 4, 128>}, {pipeline_mode = #tpu.pipeline_mode<synchronous>, transform_indices = @transform_2, window_bounds = array<i64: 1, 128>}, {transform_indices = @transform_3, window_bounds = array<i64: 64, 128>}]} {
    %c0 = arith.constant 0 : index
    %c0_0 = arith.constant 0 : index
    %0 = vector.load %arg1[%c0, %c0_0] : memref<64x4xf32, #tpu.memory_space<vmem>>, vector<64x4xf32>
    %1 = arith.truncf %0 : vector<64x4xf32> to vector<64x4xbf16>
    %c0_1 = arith.constant 0 : index
    %c0_2 = arith.constant 0 : index
    %2 = vector.load %arg2[%c0_1, %c0_2] : memref<4x128xbf16, #tpu.memory_space<vmem>>, vector<4x128xbf16>
    %cst = arith.constant dense<0.000000e+00> : vector<64x128xf32>
    %3 = tpu.matmul %1, %2, %cst {dimension_numbers = #tpu.dot_dimension_numbers<[1], [0], [0], [1], [0, 0, 1, 1], [], []>} : vector<64x4xbf16>, vector<4x128xbf16>, vector<64x128xf32> -> vector<64x128xf32>
    %c0_3 = arith.constant 0 : index
    %c0_4 = arith.constant 0 : index
    %4 = vector.load %arg3[%c0_3, %c0_4] : memref<1x128xf32, #tpu.memory_space<vmem>>, vector<1x128xf32>
    %5 = vector.broadcast %4 : vector<1x128xf32> to vector<64x128xf32>
    %6 = arith.addf %3, %5 : vector<64x128xf32>
    %c0_5 = arith.constant 0 : index
    %c0_6 = arith.constant 0 : index
    %7 = vector.load %arg4[%c0_5, %c0_6] : memref<64x128xf32, #tpu.memory_space<vmem>>, vector<64x128xf32>
    tpu.vector_store %arg4[%c0_5, %c0_6], %6 {strides = array<i32>} : memref<64x128xf32, #tpu.memory_space<vmem>>, vector<64x128xf32>,
    return
  }
  func.func @transform_0(%arg0: i32) -> (i32, i32) {
    %c0_i32 = arith.constant 0 : i32
    %c0_i32_0 = arith.constant 0 : i32
    return %arg0, %c0_i32 : i32, i32
  }
  func.func @transform_1(%arg0: i32) -> (i32, i32) {
    %c0_i32 = arith.constant 0 : i32
    %c0_i32_0 = arith.constant 0 : i32
    %c0_i32_1 = arith.constant 0 : i32
    return %c0_i32, %c0_i32_0 : i32, i32
  }
  func.func @transform_2(%arg0: i32) -> (i32, i32) {
    %c0_i32 = arith.constant 0 : i32
    %c0_i32_0 = arith.constant 0 : i32
    %c0_i32_1 = arith.constant 0 : i32
    return %c0_i32, %c0_i32_0 : i32, i32
  }
  func.func @transform_3(%arg0: i32) -> (i32, i32) {
    %c0_i32 = arith.constant 0 : i32
    %c0_i32_0 = arith.constant 0 : i32
    return %arg0, %c0_i32 : i32, i32
  }
}

</mosaic_0001>

<llo_original>
// kernel: tpu_custom_call.1
$region0: #{tpu_custom_call.1}
  #allocation0 [shape = 'u32[]', space=smem, size = 0x4, offset = 0x4, fixed_abs, tag = 'smem constant byte address 0x4 - core index']
  #allocation1 [shape = 'u32[144,128]{1,0:T(1,128)}', space=vmem, size = 0x12000, scoped, tag = 'internal scratch']
  %s0 = inlined_call_operand.vmem [shape: f32[64,4], index: 0, kind: input, shape index: {}]
  %s1 = inlined_call_operand.vmem [shape: bf16[4,128], index: 1, kind: input, shape index: {}]
  %s2 = inlined_call_operand.vmem [shape: f32[1,128], index: 2, kind: input, shape index: {}]
  %s3 = inlined_call_operand.hbm [shape: f32[64,128], index: 3, kind: output, shape index: {}]
  %s4 = sld [smem:[#allocation0]]
  $region22: #{tpu_custom_call.1} parent=0
    _
  %s6 = ssub.s32 1, %s4
  %s7 = scalar_select 0, %s6, %s4
  $region1: #{tpu_custom_call.1} parent=0
    #allocation2 [shape = 'u8[32768]{0}', space=vmem, size = 0x8000, scoped, tag = 'output window, operand 0, single buffered']
    #allocation3 [shape = 's32[1]{0}', space=sflag, size = 0x4, scoped, tag = 'scoped memory for tpu_custom_call.1']
    %8 = vsyncpa [#allocation3], 0
    // Predicated region
    $region2: #{tpu_custom_call.1} parent=1 // pred_check
      _
    $region3: #{tpu_custom_call.1} parent=1 // pred_check_branch
      %10 = sbr.rel (0) target = $region5
    $region4: #{tpu_custom_call.1} parent=1 // pred_region
      _
    $region5: #{tpu_custom_call.1} parent=1 // pred_fallthru
      _
    // Predicated region
    $region6: #{tpu_custom_call.1} parent=1 // pred_check
      _
    $region7: #{tpu_custom_call.1} parent=1 // pred_check_branch
      %12 = sbr.rel (0) target = $region9
    $region8: #{tpu_custom_call.1} parent=1 // pred_region
      _
    $region9: #{tpu_custom_call.1} parent=1 // pred_fallthru
      _
    // Predicated region
    $region10: #{tpu_custom_call.1} parent=1 // pred_check
      _
    $region11: #{tpu_custom_call.1} parent=1 // pred_check_branch
      %14 = sbr.rel (0) target = $region13
    $region12: #{tpu_custom_call.1} parent=1 // pred_region
      _
    $region13: #{tpu_custom_call.1} parent=1 // pred_fallthru
      _
    %v16 = vld [vmem:[%s0] sm:$0xff]
    %v17 = vld [vmem:[%s0 + $0x8] sm:$0xff]
    %v18 = vld [vmem:[%s0 + $0x10] sm:$0xff]
    %v19 = vld [vmem:[%s0 + $0x18] sm:$0xff]
    %v20 = vld [vmem:[%s0 + $0x20] sm:$0xff]
    %v21 = vld [vmem:[%s0 + $0x28] sm:$0xff]
    %v22 = vld [vmem:[%s0 + $0x30] sm:$0xff]
    %v23 = vld [vmem:[%s0 + $0x38] sm:$0xff]
    %v24 = vpack.c.bf16 %v17, %v16
    %v25 = vpack.c.bf16 %v19, %v18
    %v26 = vpack.c.bf16 %v21, %v20
    %v27 = vpack.c.bf16 %v23, %v22
    %v28 = vld [vmem:[%s1] sm:$0x3]
    %v29 = vld [vmem:[%s2] sm:$0x1]
    %v31 = vlaneseq
    %v32 = vshrl.u32 %v31, 7
    %v33 = vsub.s32 0, %v32
    %v34 = vrot.slane %v29, %v33
    %vm36 = vcmask 31744
    %v38 = vsel %vm36, %v24, 0
    %v41 = vsel %vm36, %v25, 0
    %v44 = vsel %vm36, %v26, 0
    %v47 = vsel %vm36, %v27, 0
    %vm49 = vcmask 1041408
    %v51 = vsel %vm49, %v28, 0
    %53 = vmatprep.subr.bf16.mxu0 0
    %54 = vmatpush1.bf16.msra.mxu0 0
    %55 = vmatprep.subr.bf16.mxu0 0
    %56 = vmatpush1.bf16.msra.mxu0 0
    %57 = vmatprep.subr.bf16.mxu0 0
    %58 = vmatpush1.bf16.msra.mxu0 0
    %59 = vmatprep.subr.bf16.mxu0 0
    %60 = vmatpush1.bf16.msra.mxu0 0
    %61 = vmatprep.subr.bf16.mxu0 0
    %62 = vmatpush1.bf16.msra.mxu0 0
    %63 = vmatprep.subr.bf16.mxu0 0
    %64 = vmatpush1.bf16.msra.mxu0 0
    %65 = vmatprep.subr.bf16.mxu0 0
    %66 = vmatpush1.bf16.msra.mxu0 0
    %67 = vmatprep.subr.bf16.mxu0 0
    %68 = vmatpush1.bf16.msra.mxu0 %v51
    %69 = vmatprep.subr.bf16.mxu0 0
    %70 = vmatpush2.bf16.msra.mxu0 0
    %71 = vmatprep.subr.bf16.mxu0 0
    %72 = vmatpush2.bf16.msra.mxu0 0
    %73 = vmatprep.subr.bf16.mxu0 0
    %74 = vmatpush2.bf16.msra.mxu0 0
    %75 = vmatprep.subr.bf16.mxu0 0
    %76 = vmatpush2.bf16.msra.mxu0 0
    %77 = vmatprep.subr.bf16.mxu0 0
    %78 = vmatpush2.bf16.msra.mxu0 0
    %79 = vmatprep.subr.bf16.mxu0 0
    %80 = vmatpush2.bf16.msra.mxu0 0
    %81 = vmatprep.subr.bf16.mxu0 0
    %82 = vmatpush2.bf16.msra.mxu0 0
    %83 = vmatprep.subr.bf16.mxu0 0
    %84 = vmatpush2.bf16.msra.mxu0 0
    %85 = vmatprep.mubr.bf16.mxu0 0
    %86 = vmatmul.mubr.bf16.gmra.mxu0 %v38
    %v87 = vpop.f32.mrf.mxu0
    %v88 = vadd.f32 %v34, %v87
    %v89 = vpop.f32.mrf.mxu0
    %v90 = vpop.f32.mrf.mxu0
    %v91 = vadd.f32 %v34, %v90
    %v92 = vpop.f32.mrf.mxu0
    %93 = vmatprep.mubr.bf16.mxu0 0
    %94 = vmatmul.mubr.bf16.gmra.mxu0 %v41
    %v95 = vpop.f32.mrf.mxu0
    %v96 = vadd.f32 %v34, %v95
    %v97 = vpop.f32.mrf.mxu0
    %v98 = vpop.f32.mrf.mxu0
    %v99 = vadd.f32 %v34, %v98
    %v100 = vpop.f32.mrf.mxu0
    %101 = vmatprep.mubr.bf16.mxu0 0
    %102 = vmatmul.mubr.bf16.gmra.mxu0 %v44
    %v103 = vpop.f32.mrf.mxu0
    %v104 = vadd.f32 %v34, %v103
    %v105 = vpop.f32.mrf.mxu0
    %v106 = vpop.f32.mrf.mxu0
    %v107 = vadd.f32 %v34, %v106
    %v108 = vpop.f32.mrf.mxu0
    %109 = vmatprep.mubr.bf16.mxu0 0
    %110 = vmatmul.mubr.bf16.gmra.mxu0 %v47
    %v111 = vpop.f32.mrf.mxu0
    %v112 = vadd.f32 %v34, %v111
    %v113 = vpop.f32.mrf.mxu0
    %v114 = vpop.f32.mrf.mxu0
    %v115 = vadd.f32 %v34, %v114
    %v116 = vpop.f32.mrf.mxu0
    %117 = vdwg.mxu0
    %118 = vst [vmem:[#allocation2] sm:$0xff] %v88
    %119 = vst [vmem:[#allocation2 + $0x8] sm:$0xff] %v91
    %120 = vst [vmem:[#allocation2 + $0x10] sm:$0xff] %v96
    %121 = vst [vmem:[#allocation2 + $0x18] sm:$0xff] %v99
    %122 = vst [vmem:[#allocation2 + $0x20] sm:$0xff] %v104
    %123 = vst [vmem:[#allocation2 + $0x28] sm:$0xff] %v107
    %124 = vst [vmem:[#allocation2 + $0x30] sm:$0xff] %v112
    %125 = vst [vmem:[#allocation2 + $0x38] sm:$0xff] %v115
    // Predicated region
    $region14: #{tpu_custom_call.1} parent=1 // pred_check
      _
    $region15: #{tpu_custom_call.1} parent=1 // pred_check_branch
      %127 = sbr.rel (0) target = $region17
    $region16: #{tpu_custom_call.1} parent=1 // pred_region
      %s129 = ssub.s32 1024, 1024
      %130 = vsyncadd [#allocation3], %s129
      %s131 = sshll.u32 [#allocation2], 4
      %s132 = int_to_ptr.vmem [resolvable:$true] %s131
      %137 = dma.vmem_to_hbm [thread:$0]  %s132, 1024, %s3, [#allocation3], 128, 128, 8
    $region17: #{tpu_custom_call.1} parent=1 // pred_fallthru
      _
    // Predicated region
    $region18: #{tpu_custom_call.1} parent=1 // pred_check
      _
    $region19: #{tpu_custom_call.1} parent=1 // pred_check_branch
      %139 = sbr.rel (0) target = $region21
    $region20: #{tpu_custom_call.1} parent=1 // pred_region
      %140 = dma.done [#allocation3], 1024
    $region21: #{tpu_custom_call.1} parent=1 // pred_fallthru
      _
    %141 = vsyncpa [#allocation3], 1

</llo_original>
